<compile_context>
chip_gen: v7x
topology: tpu7x:2x2x1
jax: 0.10.0
libtpu: 0.0.40
codegen_flags: <defaults>
</compile_context>

<pallas_src>
import functools
import math

import jax
import jax.numpy as jnp
from jax import lax
from jax.experimental import pallas as pl
from jax.experimental.pallas import tpu as pltpu


# ----------------------------------------------------------------------------
# Kernel 1: fused, row-tiled Q/K/V projection
# ----------------------------------------------------------------------------
def qkv_proj_kernel(x_ref, w_ref, b_ref, q_ref, k_ref, v_ref, *, d_model):
    # bf16 MXU operands, f32 accumulation.
    x = x_ref[...].astype(jnp.bfloat16)                                 # [TM, D]
    acc = jnp.dot(x, w_ref[...], preferred_element_type=jnp.float32)    # [TM, 3D]
    acc = acc + b_ref[...]                                              # f32 bias
    D = d_model
    q_ref[...] = acc[:, 0 * D:1 * D].astype(q_ref.dtype)
    k_ref[...] = acc[:, 1 * D:2 * D].astype(k_ref.dtype)
    v_ref[...] = acc[:, 2 * D:3 * D].astype(v_ref.dtype)


def qkv_projection(x_flat, w_qkv, b_qkv):
    N, D = x_flat.shape
    D3 = w_qkv.shape[1]
    # Row tile: big enough to amortize per-step overhead, small enough that
    # (x tile + fused weight + 3 output tiles), double-buffered, fits the
    # default scoped VMEM on every generation (incl. v7x's 64 MiB).
    TM = min(N, 256)
    row_spec = pl.BlockSpec((TM, D), lambda i: (i, 0))
    out = jax.ShapeDtypeStruct((N, D), jnp.bfloat16)
    return pl.pallas_call(
        functools.partial(qkv_proj_kernel, d_model=D),
        out_shape=(out, out, out),
        grid_spec=pltpu.PrefetchScalarGridSpec(
            num_scalar_prefetch=0,
            grid=(pl.cdiv(N, TM),),
            in_specs=[row_spec,
                      pl.BlockSpec((D, D3), lambda i: (0, 0)),   # fused weight
                      pl.BlockSpec((1, D3), lambda i: (0, 0))],  # fused bias
            out_specs=(row_spec, row_spec, row_spec),
        ),
        compiler_params=pltpu.CompilerParams(
            dimension_semantics=("parallel",)),
    )(x_flat, w_qkv, b_qkv)


# ----------------------------------------------------------------------------
# Kernel 2: per-batch multi-head scaled dot-product attention
# ----------------------------------------------------------------------------
def attn_kernel(q_ref, k_ref, v_ref, ctx_ref, probs_ref, *, num_heads,
                head_size):
    q = q_ref[0]                                              # [S, D] bf16
    k = k_ref[0]
    v = v_ref[0]
    # Fold 1/sqrt(dh) into q once (S*D mults instead of S*S per head).
    q = q * jnp.asarray(1.0 / math.sqrt(head_size), q.dtype)

    ctx_parts = []
    for h in range(num_heads):
        sl = slice(h * head_size, (h + 1) * head_size)
        # Q_h K_h^T without materializing a transpose: contract last dims.
        scores = lax.dot_general(
            q[:, sl], k[:, sl],
            dimension_numbers=(((1,), (1,)), ((), ())),
            preferred_element_type=jnp.float32)               # [S, S] f32

        # Numerically stable softmax in f32; approx reciprocal runs on the EUP.
        m = jnp.max(scores, axis=-1, keepdims=True)
        e = jnp.exp(scores - m)
        denom = jnp.sum(e, axis=-1, keepdims=True)
        probs = e * pl.reciprocal(denom, approx=True)         # [S, S] f32

        probs_ref[0, h] = probs
        ctx_parts.append(
            jnp.dot(probs.astype(v.dtype), v[:, sl],
                    preferred_element_type=jnp.float32))      # [S, dh] f32

    # One lane-dense [S, D] store (avoids sub-128-lane masked writebacks).
    ctx_ref[0] = jnp.concatenate(ctx_parts, axis=-1)


def attention(q, k, v, num_heads, head_size):
    # q, k, v: [B, S, D] bf16 (head-interleaved along the lane dimension)
    B, S, D = q.shape
    qkv_spec = pl.BlockSpec((1, S, D), lambda b: (b, 0, 0))
    probs_spec = pl.BlockSpec((1, num_heads, S, S), lambda b: (b, 0, 0, 0))
    return pl.pallas_call(
        functools.partial(attn_kernel, num_heads=num_heads,
                          head_size=head_size),
        out_shape=(jax.ShapeDtypeStruct((B, S, D), jnp.float32),
                   jax.ShapeDtypeStruct((B, num_heads, S, S), jnp.float32)),
        grid_spec=pltpu.PrefetchScalarGridSpec(
            num_scalar_prefetch=0,
            grid=(B,),
            in_specs=[qkv_spec, qkv_spec, qkv_spec],
            out_specs=(qkv_spec, probs_spec),
        ),
        compiler_params=pltpu.CompilerParams(
            dimension_semantics=("parallel",)),
    )(q, k, v)


# ----------------------------------------------------------------------------
# Module wrapper (glue in plain JAX: only free reshapes, no HBM transposes)
# ----------------------------------------------------------------------------
def multi_head_attention(hidden_states, params, num_heads):
    B, S, D = hidden_states.shape
    dh = D // num_heads

    x_flat = hidden_states.reshape(B * S, D).astype(jnp.float32)

    # Fuse the three projections into a single [D, 3D] matmul.  In a real
    # model this concat/cast happens once at parameter-load time.
    w_qkv = jnp.concatenate([params["wq"], params["wk"], params["wv"]],
                            axis=1).astype(jnp.bfloat16)
    b_qkv = jnp.concatenate([params["bq"], params["bk"], params["bv"]],
                            axis=1).astype(jnp.float32)

    q2, k2, v2 = qkv_projection(x_flat, w_qkv, b_qkv)

    # [B*S, D] -> [B, S, D] is a layout-preserving (free) reshape; heads are
    # sliced out of the lane dimension inside the attention kernel, so no
    # [B,S,H,dh] -> [B,H,S,dh] HBM transpose is ever materialized.
    q3, k3, v3 = (t.reshape(B, S, D) for t in (q2, k2, v2))

    ctx, probs = attention(q3, k3, v3, num_heads, dh)
    # output_attentions=True by default -> (context_layer, attention_probs)
    return ctx, probs


# ----------------------------------------------------------------------------
# Pure-JAX reference for correctness
# ----------------------------------------------------------------------------
def reference_mha(hidden_states, params, num_heads):
    B, S, D = hidden_states.shape
    dh = D // num_heads
    x = hidden_states.astype(jnp.float32)
    q = x @ params["wq"] + params["bq"][0]
    k = x @ params["wk"] + params["bk"][0]
    v = x @ params["wv"] + params["bv"][0]

    def split_heads(t):
        return t.reshape(B, S, num_heads, dh).transpose(0, 2, 1, 3)

    q, k, v = split_heads(q), split_heads(k), split_heads(v)
    scores = jnp.einsum("bhqd,bhkd->bhqk", q, k) / math.sqrt(dh)
    probs = jax.nn.softmax(scores, axis=-1)
    ctx = jnp.einsum("bhqk,bhkd->bhqd", probs, v)
    context = ctx.transpose(0, 2, 1, 3).reshape(B, S, D)
    return context, probs


if __name__ == "__main__":
    B, S, D, H = 2, 8, 32, 4            # batch, seq, d_model, num_heads

    key = jax.random.PRNGKey(0)
    kx, kq, kk, kv, kbq, kbk, kbv = jax.random.split(key, 7)

    hidden_states = jax.random.normal(kx, (B, S, D), dtype=jnp.float32)

    # nn.Linear(d_model, d_model) weights, stored pre-transposed ([in, out]).
    scale = 1.0 / math.sqrt(D)
    params = {
        "wq": jax.random.uniform(kq, (D, D), jnp.float32, -scale, scale),
        "wk": jax.random.uniform(kk, (D, D), jnp.float32, -scale, scale),
        "wv": jax.random.uniform(kv, (D, D), jnp.float32, -scale, scale),
        "bq": jax.random.uniform(kbq, (1, D), jnp.float32, -scale, scale),
        "bk": jax.random.uniform(kbk, (1, D), jnp.float32, -scale, scale),
        "bv": jax.random.uniform(kbv, (1, D), jnp.float32, -scale, scale),
    }

    context, probs = multi_head_attention(hidden_states, params, H)
    context = jax.block_until_ready(context)
    probs = jax.block_until_ready(probs)

    ref_ctx, ref_probs = reference_mha(hidden_states, params, H)
    assert context.shape == (B, S, D)
    assert probs.shape == (B, H, S, S)
    # Tolerances loosened vs. the pure-f32 version: matmul operands are bf16
    # (f32 accumulation) and the softmax reciprocal is the approximate EUP op.
    assert jnp.allclose(context, ref_ctx, atol=2e-2, rtol=2e-2)
    assert jnp.allclose(probs, ref_probs, atol=2e-2, rtol=2e-2)

    print("KERNEL_OK")
</pallas_src>

<mosaic_0001>
module attributes {stable_mosaic.version = 11 : i64} {
  func.func @qkv_proj_kernel(%arg0: i32, %arg1: memref<16x32xf32, #tpu.memory_space<vmem>>, %arg2: memref<32x96xbf16, #tpu.memory_space<vmem>>, %arg3: memref<1x96xf32, #tpu.memory_space<vmem>>, %arg4: memref<16x32xbf16, #tpu.memory_space<vmem>>, %arg5: memref<16x32xbf16, #tpu.memory_space<vmem>>, %arg6: memref<16x32xbf16, #tpu.memory_space<vmem>>) attributes {dimension_semantics = [#tpu.dimension_semantics<parallel>], iteration_bounds = array<i64: 1>, scalar_prefetch = 0 : i64, scratch_operands = 0 : i64, tpu.core_type = #tpu.core_type<tc>, window_params = [{transform_indices = @transform_0, window_bounds = array<i64: 16, 32>}, {pipeline_mode = #tpu.pipeline_mode<synchronous>, transform_indices = @transform_1, window_bounds = array<i64: 32, 96>}, {pipeline_mode = #tpu.pipeline_mode<synchronous>, transform_indices = @transform_2, window_bounds = array<i64: 1, 96>}, {transform_indices = @transform_3, window_bounds = array<i64: 16, 32>}, {transform_indices = @transform_4, window_bounds = array<i64: 16, 32>}, {transform_indices = @transform_5, window_bounds = array<i64: 16, 32>}]} {
    %c0 = arith.constant 0 : index
    %c0_0 = arith.constant 0 : index
    %0 = vector.load %arg1[%c0, %c0_0] : memref<16x32xf32, #tpu.memory_space<vmem>>, vector<16x32xf32>
    %1 = arith.truncf %0 : vector<16x32xf32> to vector<16x32xbf16>
    %c0_1 = arith.constant 0 : index
    %c0_2 = arith.constant 0 : index
    %2 = vector.load %arg2[%c0_1, %c0_2] : memref<32x96xbf16, #tpu.memory_space<vmem>>, vector<32x96xbf16>
    %cst = arith.constant dense<0.000000e+00> : vector<16x96xf32>
    %3 = tpu.matmul %1, %2, %cst {dimension_numbers = #tpu.dot_dimension_numbers<[1], [0], [0], [1], [0, 0, 1, 1], [], []>} : vector<16x32xbf16>, vector<32x96xbf16>, vector<16x96xf32> -> vector<16x96xf32>
    %c0_3 = arith.constant 0 : index
    %c0_4 = arith.constant 0 : index
    %4 = vector.load %arg3[%c0_3, %c0_4] : memref<1x96xf32, #tpu.memory_space<vmem>>, vector<1x96xf32>
    %5 = vector.broadcast %4 : vector<1x96xf32> to vector<16x96xf32>
    %6 = arith.addf %3, %5 : vector<16x96xf32>
    %7 = vector.extract_strided_slice %6 {offsets = [0, 0], sizes = [16, 32], strides = [1, 1]} : vector<16x96xf32> to vector<16x32xf32>
    %8 = arith.truncf %7 : vector<16x32xf32> to vector<16x32xbf16>
    %c0_5 = arith.constant 0 : index
    %c0_6 = arith.constant 0 : index
    %9 = vector.load %arg4[%c0_5, %c0_6] : memref<16x32xbf16, #tpu.memory_space<vmem>>, vector<16x32xbf16>
    tpu.vector_store %arg4[%c0_5, %c0_6], %8 {strides = array<i32>} : memref<16x32xbf16, #tpu.memory_space<vmem>>, vector<16x32xbf16>,
    %10 = vector.extract_strided_slice %6 {offsets = [0, 32], sizes = [16, 32], strides = [1, 1]} : vector<16x96xf32> to vector<16x32xf32>
    %11 = arith.truncf %10 : vector<16x32xf32> to vector<16x32xbf16>
    %c0_7 = arith.constant 0 : index
    %c0_8 = arith.constant 0 : index
    %12 = vector.load %arg5[%c0_7, %c0_8] : memref<16x32xbf16, #tpu.memory_space<vmem>>, vector<16x32xbf16>
    tpu.vector_store %arg5[%c0_7, %c0_8], %11 {strides = array<i32>} : memref<16x32xbf16, #tpu.memory_space<vmem>>, vector<16x32xbf16>,
    %13 = vector.extract_strided_slice %6 {offsets = [0, 64], sizes = [16, 32], strides = [1, 1]} : vector<16x96xf32> to vector<16x32xf32>
    %14 = arith.truncf %13 : vector<16x32xf32> to vector<16x32xbf16>
    %c0_9 = arith.constant 0 : index
    %c0_10 = arith.constant 0 : index
    %15 = vector.load %arg6[%c0_9, %c0_10] : memref<16x32xbf16, #tpu.memory_space<vmem>>, vector<16x32xbf16>
    tpu.vector_store %arg6[%c0_9, %c0_10], %14 {strides = array<i32>} : memref<16x32xbf16, #tpu.memory_space<vmem>>, vector<16x32xbf16>,
    return
  }
  func.func @transform_0(%arg0: i32) -> (i32, i32) {
    %c0_i32 = arith.constant 0 : i32
    %c0_i32_0 = arith.constant 0 : i32
    return %arg0, %c0_i32 : i32, i32
  }
  func.func @transform_1(%arg0: i32) -> (i32, i32) {
    %c0_i32 = arith.constant 0 : i32
    %c0_i32_0 = arith.constant 0 : i32
    %c0_i32_1 = arith.constant 0 : i32
    return %c0_i32, %c0_i32_0 : i32, i32
  }
  func.func @transform_2(%arg0: i32) -> (i32, i32) {
    %c0_i32 = arith.constant 0 : i32
    %c0_i32_0 = arith.constant 0 : i32
    %c0_i32_1 = arith.constant 0 : i32
    return %c0_i32, %c0_i32_0 : i32, i32
  }
  func.func @transform_3(%arg0: i32) -> (i32, i32) {
    %c0_i32 = arith.constant 0 : i32
    %c0_i32_0 = arith.constant 0 : i32
    return %arg0, %c0_i32 : i32, i32
  }
  func.func @transform_4(%arg0: i32) -> (i32, i32) {
    %c0_i32 = arith.constant 0 : i32
    %c0_i32_0 = arith.constant 0 : i32
    return %arg0, %c0_i32 : i32, i32
  }
  func.func @transform_5(%arg0: i32) -> (i32, i32) {
    %c0_i32 = arith.constant 0 : i32
    %c0_i32_0 = arith.constant 0 : i32
    return %arg0, %c0_i32 : i32, i32
  }
}

</mosaic_0001>

<llo_original>
// kernel: tpu_custom_call.1
$region0: #{tpu_custom_call.1}
  #allocation0 [shape = 'u32[]', space=smem, size = 0x4, offset = 0x4, fixed_abs, tag = 'smem constant byte address 0x4 - core index']
  #allocation1 [shape = 'u32[144,128]{1,0:T(1,128)}', space=vmem, size = 0x12000, scoped, tag = 'internal scratch']
  %s0 = inlined_call_operand.hbm [shape: f32[16,32], index: 0, kind: input, shape index: {}]
  %s1 = inlined_call_operand.hbm [shape: bf16[32,96], index: 1, kind: input, shape index: {}]
  %s2 = inlined_call_operand.vmem [shape: f32[1,96], index: 2, kind: input, shape index: {}]
  %s3 = inlined_call_operand.hbm [shape: bf16[16,32], index: 3, kind: output, shape index: {0}]
  %s4 = inlined_call_operand.hbm [shape: bf16[16,32], index: 4, kind: output, shape index: {1}]
  %s5 = inlined_call_operand.hbm [shape: bf16[16,32], index: 5, kind: output, shape index: {2}]
  %6 = xla_tuple %s3, %s4, %s5
  %s7 = sld [smem:[#allocation0]]
  $region46: #{tpu_custom_call.1} parent=0
    _
  %s9 = ssub.s32 1, %s7
  %s10 = scalar_select 0, %s9, %s7
  $region1: #{tpu_custom_call.1} parent=0
    #allocation2 [shape = 'u8[8192]{0}', space=vmem, size = 0x2000, scoped, tag = 'input window, operand 0, single buffered']
    #allocation3 [shape = 's32[1]{0}', space=sflag, size = 0x4, scoped, tag = 'scoped memory for tpu_custom_call.1']
    #allocation4 [shape = 's32[1]{0}', space=sflag, size = 0x4, scoped, tag = 'scoped memory for tpu_custom_call.1']
    #allocation5 [shape = 'u8[8192]{0}', space=vmem, size = 0x2000, scoped, tag = 'input window, operand 1, single buffered']
    #allocation6 [shape = 's32[1]{0}', space=sflag, size = 0x4, scoped, tag = 'scoped memory for tpu_custom_call.1']
    #allocation7 [shape = 'u8[4096]{0}', space=vmem, size = 0x1000, scoped, tag = 'output window, operand 0, single buffered']
    #allocation8 [shape = 'u8[4096]{0}', space=vmem, size = 0x1000, scoped, tag = 'output window, operand 1, single buffered']
    #allocation9 [shape = 's32[1]{0}', space=sflag, size = 0x4, scoped, tag = 'scoped memory for tpu_custom_call.1']
    #allocation10 [shape = 'u8[4096]{0}', space=vmem, size = 0x1000, scoped, tag = 'output window, operand 2, single buffered']
    %11 = vsyncpa [#allocation3], 0
    %12 = vsyncpa [#allocation6], 0
    %13 = vsyncpa [#allocation4], 0
    %14 = vsyncpa [#allocation9], 0
    // Predicated region
    $region2: #{tpu_custom_call.1} parent=1 // pred_check
      _
    $region3: #{tpu_custom_call.1} parent=1 // pred_check_branch
      %16 = sbr.rel (0) target = $region5
    $region4: #{tpu_custom_call.1} parent=1 // pred_region
      %s18 = ssub.s32 256, 256
      %19 = vsyncadd [#allocation3], %s18
      %s20 = sshll.u32 [#allocation2], 4
      %s21 = int_to_ptr.vmem [resolvable:$true] %s20
      %26 = dma.hbm_to_vmem [thread:$0]  %s0, 256, %s21, [#allocation3], 128, 128, 8
    $region5: #{tpu_custom_call.1} parent=1 // pred_fallthru
      _
    // Predicated region
    $region6: #{tpu_custom_call.1} parent=1 // pred_check
      _
    $region7: #{tpu_custom_call.1} parent=1 // pred_check_branch
      %28 = sbr.rel (0) target = $region9
    $region8: #{tpu_custom_call.1} parent=1 // pred_region
      %s30 = ssub.s32 256, 256
      %31 = vsyncadd [#allocation6], %s30
      %s32 = sshll.u32 [#allocation5], 4
      %s33 = int_to_ptr.vmem [resolvable:$true] %s32
      %38 = dma.hbm_to_vmem [thread:$0]  %s1, 256, %s33, [#allocation6], 64, 64, 4
    $region9: #{tpu_custom_call.1} parent=1 // pred_fallthru
      _
    // Predicated region
    $region10: #{tpu_custom_call.1} parent=1 // pred_check
      _
    $region11: #{tpu_custom_call.1} parent=1 // pred_check_branch
      %40 = sbr.rel (0) target = $region13
    $region12: #{tpu_custom_call.1} parent=1 // pred_region
      _
    $region13: #{tpu_custom_call.1} parent=1 // pred_fallthru
      _
    // Predicated region
    $region14: #{tpu_custom_call.1} parent=1 // pred_check
      _
    $region15: #{tpu_custom_call.1} parent=1 // pred_check_branch
      %42 = sbr.rel (0) target = $region17
    $region16: #{tpu_custom_call.1} parent=1 // pred_region
      %43 = dma.done [#allocation3], 256
    $region17: #{tpu_custom_call.1} parent=1 // pred_fallthru
      _
    // Predicated region
    $region18: #{tpu_custom_call.1} parent=1 // pred_check
      _
    $region19: #{tpu_custom_call.1} parent=1 // pred_check_branch
      %45 = sbr.rel (0) target = $region21
    $region20: #{tpu_custom_call.1} parent=1 // pred_region
      %46 = dma.done [#allocation6], 256
    $region21: #{tpu_custom_call.1} parent=1 // pred_fallthru
      _
    %v48 = vld [vmem:[#allocation2] sm:$0xff]
    %v49 = vld [vmem:[#allocation2 + $0x8] sm:$0xff]
    %v50 = vpack.c.bf16 %v49, %v48
    %v51 = vld [vmem:[#allocation5] sm:$0xf]
    %v52 = vld [vmem:[#allocation5 + $0x4] sm:$0xf]
    %v53 = vld [vmem:[#allocation5 + $0x8] sm:$0xf]
    %v54 = vld [vmem:[#allocation5 + $0xc] sm:$0xf]
    %v55 = vld [vmem:[%s2] sm:$0x1]
    %v57 = vlaneseq
    %v58 = vshrl.u32 %v57, 7
    %v59 = vsub.s32 0, %v58
    %v60 = vrot.slane %v55, %v59
    %v66 = vunpack.c.l.b16 %v51
    %v67 = vunpack.c.l.b16 %v52
    %v68 = vunpack.c.l.b16 %v53
    %v69 = vunpack.c.l.b16 %v54
    %v70 = vpack.c.b16 %v67, %v66
    %v71 = vpack.c.b16 %v69, %v68
    %vm74 = vcmask 261120
    %v76 = vsel %vm74, %v50, 0
    %78 = vmatprep.subr.bf16.mxu0 0
    %79 = vmatpush1.bf16.msra.mxu0 %v70
    %80 = vmatprep.subr.bf16.mxu0 0
    %81 = vmatpush1.bf16.msra.mxu0 %v71
    %82 = vmatprep.subr.bf16.mxu0 0
    %83 = vmatpush1.bf16.msra.mxu0 0
    %84 = vmatprep.subr.bf16.mxu0 0
    %85 = vmatpush1.bf16.msra.mxu0 0
    %86 = vmatprep.subr.bf16.mxu0 0
    %87 = vmatpush1.bf16.msra.mxu0 0
    %88 = vmatprep.subr.bf16.mxu0 0
    %89 = vmatpush1.bf16.msra.mxu0 0
    %90 = vmatprep.subr.bf16.mxu0 0
    %91 = vmatpush1.bf16.msra.mxu0 0
    %92 = vmatprep.subr.bf16.mxu0 0
    %93 = vmatpush1.bf16.msra.mxu0 0
    %94 = vmatprep.subr.bf16.mxu0 0
    %95 = vmatpush1.bf16.msra.mxu0 0
    %96 = vmatprep.subr.bf16.mxu0 0
    %97 = vmatpush1.bf16.msra.mxu0 0
    %98 = vmatprep.subr.bf16.mxu0 0
    %99 = vmatpush1.bf16.msra.mxu0 0
    %100 = vmatprep.subr.bf16.mxu0 0
    %101 = vmatpush1.bf16.msra.mxu0 0
    %102 = vmatprep.subr.bf16.mxu0 0
    %103 = vmatpush1.bf16.msra.mxu0 0
    %104 = vmatprep.subr.bf16.mxu0 0
    %105 = vmatpush1.bf16.msra.mxu0 0
    %106 = vmatprep.subr.bf16.mxu0 0
    %107 = vmatpush1.bf16.msra.mxu0 0
    %108 = vmatprep.subr.bf16.mxu0 0
    %109 = vmatpush1.bf16.msra.mxu0 0
    %110 = vmatprep.mubr.bf16.mxu0 0
    %111 = vmatmul.mubr.bf16.gmra.mrb[0].mxu0 %v76
    %v112 = vpop.f32.mrb[0].mxu0
    %v113 = vadd.f32 %v60, %v112
    %v114 = vpop.f32.mrb[0].mxu0
    %v115 = vpop.f32.mrb[0].mxu0
    %v116 = vadd.f32 %v60, %v115
    %v117 = vpop.f32.mrb[0].mxu0
    %118 = vdwg.mxu0
    %v119 = vpack.c.bf16 %v116, %v113
    %v121 = vunpack.c.l.b16 %v119
    %v122 = vunpack.c.h.b16 %v119
    %v123 = vpack.c.b16 %v121, %v121
    %v124 = vpack.c.b16 %v122, %v122
    %vm127 = vcmask 257024
    %128 = vst.msk [vmem:[#allocation7] sm:$0xf] %vm127, %v123
    %129 = vst.msk [vmem:[#allocation7 + $0x4] sm:$0xf] %vm127, %v124
    %130 = vrot.lane.b32.xlu0 %v123, 96
    %v131 = vpop.permute.xlu0 %130
    %132 = vrot.lane.b32.xlu0 %v124, 96
    %v133 = vpop.permute.xlu0 %132
    %136 = vst.msk [vmem:[#allocation8] sm:$0xf] %vm127, %v131
    %137 = vst.msk [vmem:[#allocation8 + $0x4] sm:$0xf] %vm127, %v133
    %138 = vrot.lane.b32.xlu0 %v123, 64
    %v139 = vpop.permute.xlu0 %138
    %140 = vrot.lane.b32.xlu0 %v124, 64
    %v141 = vpop.permute.xlu0 %140
    %144 = vst.msk [vmem:[#allocation10] sm:$0xf] %vm127, %v139
    %145 = vst.msk [vmem:[#allocation10 + $0x4] sm:$0xf] %vm127, %v141
    // Predicated region
    $region22: #{tpu_custom_call.1} parent=1 // pred_check
      _
    $region23: #{tpu_custom_call.1} parent=1 // pred_check_branch
      %147 = sbr.rel (0) target = $region25
    $region24: #{tpu_custom_call.1} parent=1 // pred_region
      %s149 = ssub.s32 128, 128
      %150 = vsyncadd [#allocation4], %s149
      %s151 = sshll.u32 [#allocation7], 4
      %s152 = int_to_ptr.vmem [resolvable:$true] %s151
      %157 = dma.vmem_to_hbm [thread:$0]  %s152, 128, %s3, [#allocation4], 64, 64, 4
    $region25: #{tpu_custom_call.1} parent=1 // pred_fallthru
      _
    // Predicated region
    $region26: #{tpu_custom_call.1} parent=1 // pred_check
      _
    $region27: #{tpu_custom_call.1} parent=1 // pred_check_branch
      %159 = sbr.rel (0) target = $region29
    $region28: #{tpu_custom_call.1} parent=1 // pred_region
      %s161 = ssub.s32 128, 128
      %162 = vsyncadd [#allocation9], %s161
      %s163 = sshll.u32 [#allocation8], 4
      %s164 = int_to_ptr.vmem [resolvable:$true] %s163
      %169 = dma.vmem_to_hbm [thread:$0]  %s164, 128, %s4, [#allocation9], 64, 64, 4
    $region29: #{tpu_custom_call.1} parent=1 // pred_fallthru
      _
    // Predicated region
    $region30: #{tpu_custom_call.1} parent=1 // pred_check
      _
    $region31: #{tpu_custom_call.1} parent=1 // pred_check_branch
      %171 = sbr.rel (0) target = $region33
    $region32: #{tpu_custom_call.1} parent=1 // pred_region
      %s173 = ssub.s32 128, 128
      %174 = vsyncadd [#allocation9], %s173
      %s175 = sshll.u32 [#allocation10], 4
      %s176 = int_to_ptr.vmem [resolvable:$true] %s175
      %181 = dma.vmem_to_hbm [thread:$0]  %s176, 128, %s5, [#allocation9], 64, 64, 4
    $region33: #{tpu_custom_call.1} parent=1 // pred_fallthru
      _
    // Predicated region
    $region34: #{tpu_custom_call.1} parent=1 // pred_check
      _
    $region35: #{tpu_custom_call.1} parent=1 // pred_check_branch
      %183 = sbr.rel (0) target = $region37
    $region36: #{tpu_custom_call.1} parent=1 // pred_region
      %184 = dma.done [#allocation4], 128
    $region37: #{tpu_custom_call.1} parent=1 // pred_fallthru
      _
    // Predicated region
    $region38: #{tpu_custom_call.1} parent=1 // pred_check
      _
    $region39: #{tpu_custom_call.1} parent=1 // pred_check_branch
      %186 = sbr.rel (0) target = $region41
    $region40: #{tpu_custom_call.1} parent=1 // pred_region
      %187 = dma.done [#allocation9], 128
    $region41: #{tpu_custom_call.1} parent=1 // pred_fallthru
      _
    // Predicated region
    $region42: #{tpu_custom_call.1} parent=1 // pred_check
      _
    $region43: #{tpu_custom_call.1} parent=1 // pred_check_branch
      %189 = sbr.rel (0) target = $region45
    $region44: #{tpu_custom_call.1} parent=1 // pred_region
      %190 = dma.done [#allocation9], 128
    $region45: #{tpu_custom_call.1} parent=1 // pred_fallthru
      _
    %191 = vsyncpa [#allocation3], 1
    %192 = vsyncpa [#allocation6], 1
    %193 = vsyncpa [#allocation4], 1
    %194 = vsyncpa [#allocation9], 1

</llo_original>
